<compile_context>
chip_gen: v7x
topology: tpu7x:2x2x1
jax: 0.10.0
libtpu: 0.0.40
codegen_flags: <defaults>
</compile_context>

<pallas_src>
import functools

import jax
import jax.numpy as jnp
from jax.experimental import pallas as pl
from jax.experimental.pallas import tpu as pltpu

LANE = 128


# ----------------------------------------------------------------------------
# Shared loss math (traced inside kernels).
# ----------------------------------------------------------------------------
def _base_loss_11(x, tgt, logp):
    """SoftTargetCrossEntropy_lgadjusted as a [1, 1] array.

    logprobs = log(exp(x)*prob / sum(exp(x)*prob)) = u - logsumexp(u),
    with u = x + log(prob)  (log(prob) is precomputed outside the kernel).
    TODO(synk): PyTorch promotes to float64 (.double()); TPU computes f32.
    """
    u = x + logp
    m = jnp.max(u, axis=-1, keepdims=True)
    logZ = m + jnp.log(jnp.sum(jnp.exp(u - m), axis=-1, keepdims=True))
    per_row = jnp.sum(-tgt * (u - logZ), axis=-1, keepdims=True)      # [B, 1]
    return jnp.mean(per_row, axis=0, keepdims=True)                   # [1, 1]


def _distill_term(teacher, kd, *, tau, distillation_type):
    """Scalar distillation loss term (teacher-dependent part)."""
    B, K = kd.shape
    if distillation_type == "soft":
        inv_tau = 1.0 / tau
        s = kd * inv_tau
        t = teacher * inv_tau
        ms = jnp.max(s, axis=-1, keepdims=True)
        mt = jnp.max(t, axis=-1, keepdims=True)
        e_s = jnp.exp(s - ms)
        e_t = jnp.exp(t - mt)
        Zs = jnp.sum(e_s, axis=-1, keepdims=True)
        Zt = jnp.sum(e_t, axis=-1, keepdims=True)
        log_p = (s - ms) - jnp.log(Zs)
        log_q = (t - mt) - jnp.log(Zt)
        # Reuse e_t / Zt for q (saves a full [B, K] exp); the EXACT [B, 1]
        # reciprocal keeps q normalized (approx=True slightly biased the KL).
        q = e_t * (1.0 / Zt)
        # F.kl_div(log_p, log_q, reduction='sum', log_target=True)
        kl_sum = jnp.sum(q * (log_q - log_p))
        return kl_sum * (tau * tau) / float(B * K)
    elif distillation_type == "hard":
        # cross_entropy(kd, teacher.argmax(-1)); argmax done as max + first
        # matching index (pure VPU/XLU ops, no argmax lowering dependence).
        col = jax.lax.broadcasted_iota(jnp.int32, (B, K), 1)
        tmax = jnp.max(teacher, axis=-1, keepdims=True)
        first_idx = jnp.min(jnp.where(teacher == tmax, col, K),
                            axis=-1, keepdims=True)                   # [B, 1]
        onehot = (col == first_idx).astype(jnp.float32)
        mk = jnp.max(kd, axis=-1, keepdims=True)
        log_sm = (kd - mk) - jnp.log(jnp.sum(jnp.exp(kd - mk), axis=-1,
                                             keepdims=True))
        return jnp.mean(-jnp.sum(onehot * log_sm, axis=-1))
    raise ValueError(f"unknown distillation_type: {distillation_type}")


# ----------------------------------------------------------------------------
# Kernels
# ----------------------------------------------------------------------------
def _fused_distill_kernel(x_ref, w_ref, b_ref, out_ref, kd_ref, tgt_ref,
                          logp_ref, loss_ref, acc_ref, base_ref,
                          *, alpha, tau, distillation_type):
    """Single-TC path: teacher matmul gridded over D + full loss epilogue."""
    k = pl.program_id(0)

    @pl.when(k == 0)
    def _():
        acc_ref[...] = jnp.zeros_like(acc_ref)
        # Teacher-independent base loss hoisted to step 0 so its exps / lane
        # reductions hide behind the W-stream DMA instead of extending the
        # latency-exposed tail after the final weight tile.
        base_ref[...] = _base_loss_11(out_ref[...].astype(jnp.float32),
                                      tgt_ref[...].astype(jnp.float32),
                                      logp_ref[...])

    # Teacher matmul: one D-tile per grid step.  x is cast per-tile (cheap VPU
    # op on a small [B, tk] tile); W arrives pre-cast to bf16 from HBM.
    acc_ref[...] += jnp.dot(x_ref[...].astype(jnp.bfloat16), w_ref[...],
                            preferred_element_type=jnp.float32)

    # Teacher-dependent epilogue: only once, under the tail of the W stream.
    @pl.when(k == pl.num_programs(0) - 1)
    def _():
        teacher = acc_ref[...] + b_ref[...]            # [B, K] teacher logits
        distill = _distill_term(teacher, kd_ref[...].astype(jnp.float32),
                                tau=tau, distillation_type=distillation_type)
        total = base_ref[...] * (1.0 - alpha) + distill * alpha   # [1, 1]
        # Lane-dense output slab; wrapper reads [0, 0].
        loss_ref[...] = jnp.broadcast_to(total, loss_ref.shape).astype(jnp.float32)


def _teacher_matmul_kernel(x_ref, w_ref, partial_ref):
    """Dual-TC path: per-core partial teacher logits over a D shard."""
    k = pl.program_id(1)

    @pl.when(k == 0)
    def _():
        partial_ref[...] = jnp.zeros_like(partial_ref)

    partial_ref[...] += jnp.dot(x_ref[...].astype(jnp.bfloat16), w_ref[...],
                                preferred_element_type=jnp.float32)


def _epilogue_kernel(partial_ref, b_ref, out_ref, kd_ref, tgt_ref, logp_ref,
                     loss_ref, *, alpha, tau, distillation_type):
    """Tiny combine + loss epilogue for the dual-TC path."""
    teacher = jnp.sum(partial_ref[...], axis=0) + b_ref[...]
    base = _base_loss_11(out_ref[...].astype(jnp.float32),
                         tgt_ref[...].astype(jnp.float32), logp_ref[...])
    distill = _distill_term(teacher, kd_ref[...].astype(jnp.float32),
                            tau=tau, distillation_type=distillation_type)
    total = base * (1.0 - alpha) + distill * alpha
    loss_ref[...] = jnp.broadcast_to(total, loss_ref.shape).astype(jnp.float32)


def _base_loss_kernel(out_ref, tgt_ref, logp_ref, loss_ref):
    """distillation_type == 'none': teacher is NOT run (PyTorch early return)."""
    base = _base_loss_11(out_ref[...].astype(jnp.float32),
                         tgt_ref[...].astype(jnp.float32), logp_ref[...])
    loss_ref[...] = jnp.broadcast_to(base, loss_ref.shape).astype(jnp.float32)


# ----------------------------------------------------------------------------
# Tiling / VMEM helpers
# ----------------------------------------------------------------------------
def _vmem_budget_bytes():
    """Generation-aware VMEM cap: ~75% of physical VMEM.

    v7x (64 MiB physical) -> ~48 MiB; v5e/v6e (128 MiB) -> ~96 MiB.
    Falls back to a conservative 48 MiB if the query is unavailable.
    """
    try:
        cap = int(pltpu.get_tpu_info().vmem_capacity_bytes)
    except Exception:  # pragma: no cover - non-TPU tracing / older jax
        cap = 64 * 1024 * 1024
    return (cap * 3) // 4


def _pick_tile_d(d_total, B, K, budget_bytes, target=4096):
    """Largest D-tile (multiple of 128, dividing d_total, <= target) that keeps
    double-buffered bf16 (tk, K) W tiles + f32 (B, tk) x tiles + the resident
    [B, K] epilogue blocks inside the VMEM budget."""
    resident = (3 * B * K + 2 * K) * 4 * 2 + B * K * 4 + LANE * 4

    def fits(tk):
        return resident + 2 * (tk * K * 2 + B * tk * 4) <= budget_bytes

    tk = min(int(target), d_total)
    tk -= tk % LANE
    while tk >= LANE:
        if d_total % tk == 0 and fits(tk):
            return tk
        tk -= LANE
    return d_total  # tiny / unaligned D: single whole-D block


# ----------------------------------------------------------------------------
# Wrappers
# ----------------------------------------------------------------------------
def prepare_teacher_params(teacher_w, teacher_b):
    """One-time teacher-head preparation (call once at setup, not per step).

    Casting W to bf16 here avoids a per-call astype that would re-read the
    full f32 weight from HBM (3-4x the traffic of the dominant W stream)."""
    K = teacher_b.reshape(-1).shape[0]
    return (jnp.asarray(teacher_w, dtype=jnp.bfloat16),
            jnp.asarray(teacher_b, dtype=jnp.float32).reshape(1, K))


def _teacher_partial_logits(x_flat, w_bf, *, B, K, D, n_split, tk, steps, budget):
    """Dual-TC matmul: grid=(n_split, steps) with the split axis 'parallel'."""
    steps_per_split = steps
    x_map = lambda c, k: (0, c * steps_per_split + k)
    w_map = lambda c, k: (c * steps_per_split + k, 0)

    return pl.pallas_call(
        _teacher_matmul_kernel,
        out_shape=jax.ShapeDtypeStruct((n_split, B, K), jnp.float32),
        grid_spec=pltpu.PrefetchScalarGridSpec(
            num_scalar_prefetch=0,
            grid=(n_split, steps),
            in_specs=[pl.BlockSpec((B, tk), x_map),     # x tile (f32, cast in-kernel)
                      pl.BlockSpec((tk, K), w_map)],    # W tile (bf16)
            out_specs=pl.BlockSpec((None, B, K), lambda c, k: (c, 0, 0)),
        ),
        compiler_params=pltpu.CompilerParams(
            dimension_semantics=("parallel", "arbitrary"),
            vmem_limit_bytes=budget),
        cost_estimate=pl.CostEstimate(
            flops=2 * B * D * K, transcendentals=0,
            bytes_accessed=D * K * 2 + B * D * 4 + n_split * B * K * 4),
    )(x_flat, w_bf)


def _epilogue_call(partials, b2d, outputs, outputs_kd, labels, logp,
                   *, alpha, tau, distillation_type):
    kernel = functools.partial(_epilogue_kernel, alpha=float(alpha),
                               tau=float(tau),
                               distillation_type=distillation_type)
    out = pl.pallas_call(
        kernel,
        out_shape=jax.ShapeDtypeStruct((1, LANE), jnp.float32),
        in_specs=[pl.BlockSpec(memory_space=pltpu.MemorySpace.VMEM)] * 6,
        out_specs=pl.BlockSpec(memory_space=pltpu.MemorySpace.VMEM),
    )(partials, b2d, outputs, outputs_kd, labels, logp)
    return out[0, 0]


def distillation_loss_fused(inputs, outputs, outputs_kd, labels, prob_list,
                            teacher_w, teacher_b, *, alpha, tau,
                            distillation_type, tile_d=4096, n_split=1):
    B, K = outputs.shape
    x_flat = inputs.reshape(B, -1)            # NCHW row-major flatten (stays f32)
    D = x_flat.shape[1]

    # No-op when prepare_teacher_params() was used (recommended).
    w_bf = teacher_w if teacher_w.dtype == jnp.bfloat16 else teacher_w.astype(jnp.bfloat16)
    b2d = teacher_b.reshape(1, K).astype(jnp.float32)
    logp = jnp.log(prob_list.reshape(1, K).astype(jnp.float32))   # hoisted

    outputs = outputs.astype(jnp.float32)
    outputs_kd = outputs_kd.astype(jnp.float32)
    labels = labels.astype(jnp.float32)

    budget = _vmem_budget_bytes()
    if n_split > 1 and D % n_split != 0:
        n_split = 1                                  # fall back, same semantics
    d_split = D // n_split
    tk = _pick_tile_d(d_split, B, K, budget, target=tile_d)
    steps = d_split // tk

    if n_split > 1:
        # v7x: shard disjoint D halves of the weight stream across both TCs.
        partials = _teacher_partial_logits(x_flat, w_bf, B=B, K=K, D=D,
                                           n_split=n_split, tk=tk, steps=steps,
                                           budget=budget)
        return _epilogue_call(partials, b2d, outputs, outputs_kd, labels, logp,
                              alpha=alpha, tau=tau,
                              distillation_type=distillation_type)

    # Single-TC fully fused path.
    kernel = functools.partial(_fused_distill_kernel, alpha=float(alpha),
                               tau=float(tau),
                               distillation_type=distillation_type)

    # NOTE(review): keep B a multiple of 16 (bf16 sublane packing) when the
    # batch is tunable; the (B, tk) block must stay the full-batch block.
    w_spec = pl.BlockSpec((tk, K), lambda k: (k, 0))
    # Deeper W-stream pipelining when the D loop is long and VMEM allows
    # (v5e/v6e headroom); automatically skipped on tight budgets (v7x).
    resident = (3 * B * K + 2 * K) * 4 * 2 + B * K * 4 + LANE * 4
    if steps >= 3 and resident + 3 * tk * K * 2 + 2 * B * tk * 4 <= budget:
        w_spec = pl.BlockSpec((tk, K), lambda k: (k, 0),
                              pipeline_mode=pl.Buffered(3))

    cost = pl.CostEstimate(
        flops=2 * B * D * K,
        transcendentals=5 * B * K,
        bytes_accessed=D * K * 2 + B * D * 4 + 3 * B * K * 4 + 2 * K * 4 + LANE * 4,
    )

    out = pl.pallas_call(
        kernel,
        out_shape=jax.ShapeDtypeStruct((1, LANE), jnp.float32),
        grid_spec=pltpu.PrefetchScalarGridSpec(
            num_scalar_prefetch=0,
            grid=(steps,),
            in_specs=[
                pl.BlockSpec((B, tk), lambda k: (0, k)),   # x tile (f32)
                w_spec,                                    # teacher W tile (bf16)
                pl.BlockSpec((1, K), lambda k: (0, 0)),    # teacher bias
                pl.BlockSpec((B, K), lambda k: (0, 0)),    # class-token logits
                pl.BlockSpec((B, K), lambda k: (0, 0)),    # dist-token logits
                pl.BlockSpec((B, K), lambda k: (0, 0)),    # soft targets
                pl.BlockSpec((1, K), lambda k: (0, 0)),    # log class prior
            ],
            out_specs=pl.BlockSpec((1, LANE), lambda k: (0, 0)),
            scratch_shapes=[pltpu.VMEM((B, K), jnp.float32),   # f32 teacher acc
                            pltpu.VMEM((1, 1), jnp.float32)],  # hoisted base loss
        ),
        compiler_params=pltpu.CompilerParams(
            dimension_semantics=("arbitrary",),   # D is the contraction axis
            vmem_limit_bytes=budget,
        ),
        cost_estimate=cost,
    )(x_flat, w_bf, b2d, outputs, outputs_kd, labels, logp)
    return out[0, 0]


def base_loss_only(outputs, labels, prob_list):
    _, K = outputs.shape
    logp = jnp.log(prob_list.reshape(1, K).astype(jnp.float32))
    out = pl.pallas_call(
        _base_loss_kernel,
        out_shape=jax.ShapeDtypeStruct((1, LANE), jnp.float32),
        in_specs=[pl.BlockSpec(memory_space=pltpu.MemorySpace.VMEM)] * 3,
        out_specs=pl.BlockSpec(memory_space=pltpu.MemorySpace.VMEM),
    )(outputs.astype(jnp.float32), labels.astype(jnp.float32), logp)
    return out[0, 0]


def distillation_loss_module(inputs, outputs, labels, weighting,
                             teacher_w, teacher_b, prob_list,
                             *, alpha, tau, distillation_type="soft",
                             tile_d=4096, n_split=1):
    """Mirrors DistillationLoss.forward with lgadjust=True. `weighting` unused.

    n_split: number of D shards run under a 'parallel' grid axis.  Set to 2 on
    v7x (2 TensorCores/chip) so both cores stream disjoint weight halves;
    leave at 1 on v5e/v6e (single TC).  Correct on any chip."""
    del weighting
    outputs_kd = None
    if isinstance(outputs, (tuple, list)):
        outputs, outputs_kd = outputs
    if distillation_type == "none":
        return base_loss_only(outputs, labels, prob_list)
    if outputs_kd is None:
        raise ValueError(
            "When knowledge distillation is enabled, the model is expected to "
            "return a Tuple[Tensor, Tensor] (class_token, dist_token) outputs")
    # TODO(synk): teacher runs under torch.no_grad(); these kernels are
    # forward-only (no custom VJP), so gradients do not flow through this loss.
    return distillation_loss_fused(inputs, outputs, outputs_kd, labels,
                                   prob_list, teacher_w, teacher_b,
                                   alpha=alpha, tau=tau,
                                   distillation_type=distillation_type,
                                   tile_d=tile_d, n_split=n_split)


# ----------------------------------------------------------------------------
# Pure-JAX reference (teacher operands rounded to bf16 to mirror the MXU path).
# ----------------------------------------------------------------------------
def _reference_loss(inputs, outputs, outputs_kd, labels, prob_list, w_bf, b2d,
                    *, alpha, tau, distillation_type):
    B, K = outputs.shape
    x = inputs.reshape(B, -1).astype(jnp.bfloat16).astype(jnp.float32)
    teacher = x @ w_bf.astype(jnp.float32) + b2d.astype(jnp.float32)
    logp = jnp.log(prob_list.reshape(1, K).astype(jnp.float32))
    u = outputs.astype(jnp.float32) + logp
    logprobs = u - jax.scipy.special.logsumexp(u, axis=-1, keepdims=True)
    base = jnp.mean(jnp.sum(-labels * logprobs, axis=-1))
    if distillation_type == "none":
        return base
    if distillation_type == "soft":
        log_p = jax.nn.log_softmax(outputs_kd / tau, axis=-1)
        log_q = jax.nn.log_softmax(teacher / tau, axis=-1)
        dist = jnp.sum(jnp.exp(log_q) * (log_q - log_p)) * (tau * tau) / (B * K)
    else:
        idx = jnp.argmax(teacher, axis=-1)
        log_sm = jax.nn.log_softmax(outputs_kd, axis=-1)
        dist = -jnp.mean(log_sm[jnp.arange(B), idx])
    return base * (1.0 - alpha) + dist * alpha


if __name__ == "__main__":
    key = jax.random.PRNGKey(0)
    B, C, H, W = 8, 4, 16, 16     # small demo shapes; B multiple of 8
    K = 128                       # number of classes (lane-dense)
    D = C * H * W                 # flattened image dim = 1024

    k1, k2, k3, k4, k5, k6 = jax.random.split(key, 6)
    inputs = jax.random.normal(k1, (B, C, H, W), dtype=jnp.float32)
    outputs = jax.random.normal(k2, (B, K), dtype=jnp.float32)      # class token
    outputs_kd = jax.random.normal(k3, (B, K), dtype=jnp.float32)   # dist token
    labels = jax.nn.softmax(jax.random.normal(k4, (B, K), dtype=jnp.float32), axis=-1)

    # Deterministic teacher parameters (replaces the wrapped teacher_model).
    teacher_w = 0.02 * jax.random.normal(k5, (D, K), dtype=jnp.float32)
    teacher_b = 0.01 * jax.random.normal(k6, (1, K), dtype=jnp.float32)
    # Deterministic class prior (replaces torch.load('imagenet_probabilities.pt')).
    prob_list = jax.nn.softmax(jnp.linspace(0.0, 1.0, K, dtype=jnp.float32))

    # One-time teacher-head prep: bf16 weights cast ONCE, not per call.
    w_bf, b2d = prepare_teacher_params(teacher_w, teacher_b)

    run = functools.partial(distillation_loss_module,
                            inputs, (outputs, outputs_kd), labels, None,
                            w_bf, b2d, prob_list, alpha=0.5, tau=3.0)

    loss_soft = jax.block_until_ready(run(distillation_type="soft"))
    loss_soft_ms = jax.block_until_ready(run(distillation_type="soft", tile_d=512))  # multi-step D loop
    loss_soft_2c = jax.block_until_ready(run(distillation_type="soft", n_split=2))   # dual-TC (v7x) path
    loss_hard = jax.block_until_ready(run(distillation_type="hard"))
    loss_none = jax.block_until_ready(run(distillation_type="none"))

    ref = functools.partial(_reference_loss, inputs, outputs, outputs_kd, labels,
                            prob_list, w_bf, b2d, alpha=0.5, tau=3.0)
    checks = [(loss_soft, ref(distillation_type="soft")),
              (loss_hard, ref(distillation_type="hard")),
              (loss_none, ref(distillation_type="none"))]
    for got, want in checks:
        assert got.shape == () and bool(jnp.isfinite(got))
        assert abs(float(got) - float(want)) <= 2e-2 * abs(float(want)) + 1e-3, (got, want)
    assert abs(float(loss_soft_ms) - float(loss_soft)) <= 1e-3
    assert abs(float(loss_soft_2c) - float(loss_soft)) <= 1e-3
    print("KERNEL_OK")
</pallas_src>

<mosaic_0001>
module attributes {stable_mosaic.version = 11 : i64} {
  func.func @_fused_distill_kernel(%arg0: i32, %arg1: memref<8x1024xf32, #tpu.memory_space<vmem>>, %arg2: memref<1024x128xbf16, #tpu.memory_space<vmem>>, %arg3: memref<1x128xf32, #tpu.memory_space<vmem>>, %arg4: memref<8x128xf32, #tpu.memory_space<vmem>>, %arg5: memref<8x128xf32, #tpu.memory_space<vmem>>, %arg6: memref<8x128xf32, #tpu.memory_space<vmem>>, %arg7: memref<1x128xf32, #tpu.memory_space<vmem>>, %arg8: memref<1x128xf32, #tpu.memory_space<vmem>>, %arg9: memref<8x128xf32, #tpu.memory_space<vmem>>, %arg10: memref<1x1xf32, #tpu.memory_space<vmem>>) attributes {dimension_semantics = [#tpu.dimension_semantics<arbitrary>], iteration_bounds = array<i64: 1>, scalar_prefetch = 0 : i64, scratch_operands = 2 : i64, tpu.core_type = #tpu.core_type<tc>, window_params = [{transform_indices = @transform_0, window_bounds = array<i64: 8, 1024>}, {transform_indices = @transform_1, window_bounds = array<i64: 1024, 128>}, {pipeline_mode = #tpu.pipeline_mode<synchronous>, transform_indices = @transform_2, window_bounds = array<i64: 1, 128>}, {pipeline_mode = #tpu.pipeline_mode<synchronous>, transform_indices = @transform_3, window_bounds = array<i64: 8, 128>}, {pipeline_mode = #tpu.pipeline_mode<synchronous>, transform_indices = @transform_4, window_bounds = array<i64: 8, 128>}, {pipeline_mode = #tpu.pipeline_mode<synchronous>, transform_indices = @transform_5, window_bounds = array<i64: 8, 128>}, {pipeline_mode = #tpu.pipeline_mode<synchronous>, transform_indices = @transform_6, window_bounds = array<i64: 1, 128>}, {pipeline_mode = #tpu.pipeline_mode<synchronous>, transform_indices = @transform_7, window_bounds = array<i64: 1, 128>}]} {
    %c0_i32 = arith.constant 0 : i32
    %0 = arith.cmpi eq, %arg0, %c0_i32 : i32
    %1 = arith.extui %0 : i1 to i32
    %c0_i32_0 = arith.constant 0 : i32
    %2 = arith.cmpi ne, %1, %c0_i32_0 : i32
    scf.if %2 {
      %cst_10 = arith.constant 0.000000e+00 : f32
      %13 = vector.broadcast %cst_10 : f32 to vector<8x128xf32>
      %c0_11 = arith.constant 0 : index
      %c0_12 = arith.constant 0 : index
      %14 = vector.load %arg9[%c0_11, %c0_12] : memref<8x128xf32, #tpu.memory_space<vmem>>, vector<8x128xf32>
      tpu.vector_store %arg9[%c0_11, %c0_12], %13 {strides = array<i32>} : memref<8x128xf32, #tpu.memory_space<vmem>>, vector<8x128xf32>,
      %c0_13 = arith.constant 0 : index
      %c0_14 = arith.constant 0 : index
      %15 = vector.load %arg4[%c0_13, %c0_14] : memref<8x128xf32, #tpu.memory_space<vmem>>, vector<8x128xf32>
      %c0_15 = arith.constant 0 : index
      %c0_16 = arith.constant 0 : index
      %16 = vector.load %arg6[%c0_15, %c0_16] : memref<8x128xf32, #tpu.memory_space<vmem>>, vector<8x128xf32>
      %c0_17 = arith.constant 0 : index
      %c0_18 = arith.constant 0 : index
      %17 = vector.load %arg7[%c0_17, %c0_18] : memref<1x128xf32, #tpu.memory_space<vmem>>, vector<1x128xf32>
      %18 = vector.broadcast %17 : vector<1x128xf32> to vector<8x128xf32>
      %19 = arith.addf %15, %18 : vector<8x128xf32>
      %cst_19 = arith.constant dense<0xFF800000> : vector<8xf32>
      %20 = vector.multi_reduction <maximumf>, %19, %cst_19 [1] : vector<8x128xf32> to vector<8xf32>
      %21 = vector.shape_cast %20 : vector<8xf32> to vector<8x1xf32>
      %22 = vector.broadcast %21 : vector<8x1xf32> to vector<8x128xf32>
      %23 = arith.subf %19, %22 : vector<8x128xf32>
      %24 = math.exp %23 : vector<8x128xf32>
      %cst_20 = arith.constant dense<0.000000e+00> : vector<8xf32>
      %25 = vector.multi_reduction <add>, %24, %cst_20 [1] : vector<8x128xf32> to vector<8xf32>
      %26 = vector.shape_cast %25 : vector<8xf32> to vector<8x1xf32>
      %27 = math.log %26 : vector<8x1xf32>
      %28 = arith.addf %21, %27 : vector<8x1xf32>
      %cst_21 = arith.constant 0.000000e+00 : f32
      %29 = vector.broadcast %cst_21 : f32 to vector<8x128xf32>
      %30 = arith.subf %29, %16 : vector<8x128xf32>
      %31 = vector.broadcast %28 : vector<8x1xf32> to vector<8x128xf32>
      %32 = arith.subf %19, %31 : vector<8x128xf32>
      %33 = arith.mulf %30, %32 : vector<8x128xf32>
      %cst_22 = arith.constant dense<0.000000e+00> : vector<8xf32>
      %34 = vector.multi_reduction <add>, %33, %cst_22 [1] : vector<8x128xf32> to vector<8xf32>
      %35 = vector.shape_cast %34 : vector<8xf32> to vector<8x1xf32>
      %cst_23 = arith.constant dense<0.000000e+00> : vector<1xf32>
      %36 = vector.multi_reduction <add>, %35, %cst_23 [0] : vector<8x1xf32> to vector<1xf32>
      %37 = vector.shape_cast %36 : vector<1xf32> to vector<1x1xf32>
      %cst_24 = arith.constant 8.000000e+00 : f32
      %38 = vector.broadcast %cst_24 : f32 to vector<1x1xf32>
      %39 = arith.divf %37, %38 : vector<1x1xf32>
      %c0_25 = arith.constant 0 : index
      %c0_26 = arith.constant 0 : index
      %40 = vector.load %arg10[%c0_25, %c0_26] : memref<1x1xf32, #tpu.memory_space<vmem>>, vector<1x1xf32>
      tpu.vector_store %arg10[%c0_25, %c0_26], %39 {strides = array<i32>} : memref<1x1xf32, #tpu.memory_space<vmem>>, vector<1x1xf32>,
    } else {
    }
    %c0 = arith.constant 0 : index
    %c0_1 = arith.constant 0 : index
    %3 = vector.load %arg9[%c0, %c0_1] : memref<8x128xf32, #tpu.memory_space<vmem>>, vector<8x128xf32>
    %c0_2 = arith.constant 0 : index
    %c0_3 = arith.constant 0 : index
    %4 = vector.load %arg1[%c0_2, %c0_3] : memref<8x1024xf32, #tpu.memory_space<vmem>>, vector<8x1024xf32>
    %5 = arith.truncf %4 : vector<8x1024xf32> to vector<8x1024xbf16>
    %c0_4 = arith.constant 0 : index
    %c0_5 = arith.constant 0 : index
    %6 = vector.load %arg2[%c0_4, %c0_5] : memref<1024x128xbf16, #tpu.memory_space<vmem>>, vector<1024x128xbf16>
    %cst = arith.constant dense<0.000000e+00> : vector<8x128xf32>
    %7 = tpu.matmul %5, %6, %cst {dimension_numbers = #tpu.dot_dimension_numbers<[1], [0], [0], [1], [0, 0, 1, 1], [], []>} : vector<8x1024xbf16>, vector<1024x128xbf16>, vector<8x128xf32> -> vector<8x128xf32>
    %8 = arith.addf %3, %7 : vector<8x128xf32>
    %c0_6 = arith.constant 0 : index
    %c0_7 = arith.constant 0 : index
    %9 = vector.load %arg9[%c0_6, %c0_7] : memref<8x128xf32, #tpu.memory_space<vmem>>, vector<8x128xf32>
    tpu.vector_store %arg9[%c0_6, %c0_7], %8 {strides = array<i32>} : memref<8x128xf32, #tpu.memory_space<vmem>>, vector<8x128xf32>,
    %c0_i32_8 = arith.constant 0 : i32
    %10 = arith.cmpi eq, %arg0, %c0_i32_8 : i32
    %11 = arith.extui %10 : i1 to i32
    %c0_i32_9 = arith.constant 0 : i32
    %12 = arith.cmpi ne, %11, %c0_i32_9 : i32
    scf.if %12 {
      %c0_10 = arith.constant 0 : index
      %c0_11 = arith.constant 0 : index
      %13 = vector.load %arg9[%c0_10, %c0_11] : memref<8x128xf32, #tpu.memory_space<vmem>>, vector<8x128xf32>
      %c0_12 = arith.constant 0 : index
      %c0_13 = arith.constant 0 : index
      %14 = vector.load %arg3[%c0_12, %c0_13] : memref<1x128xf32, #tpu.memory_space<vmem>>, vector<1x128xf32>
      %15 = vector.broadcast %14 : vector<1x128xf32> to vector<8x128xf32>
      %16 = arith.addf %13, %15 : vector<8x128xf32>
      %c0_14 = arith.constant 0 : index
      %c0_15 = arith.constant 0 : index
      %17 = vector.load %arg5[%c0_14, %c0_15] : memref<8x128xf32, #tpu.memory_space<vmem>>, vector<8x128xf32>
      %cst_16 = arith.constant 0.333333343 : f32
      %18 = vector.broadcast %cst_16 : f32 to vector<8x128xf32>
      %19 = arith.mulf %17, %18 : vector<8x128xf32>
      %cst_17 = arith.constant 0.333333343 : f32
      %20 = vector.broadcast %cst_17 : f32 to vector<8x128xf32>
      %21 = arith.mulf %16, %20 : vector<8x128xf32>
      %cst_18 = arith.constant dense<0xFF800000> : vector<8xf32>
      %22 = vector.multi_reduction <maximumf>, %19, %cst_18 [1] : vector<8x128xf32> to vector<8xf32>
      %23 = vector.shape_cast %22 : vector<8xf32> to vector<8x1xf32>
      %cst_19 = arith.constant dense<0xFF800000> : vector<8xf32>
      %24 = vector.multi_reduction <maximumf>, %21, %cst_19 [1] : vector<8x128xf32> to vector<8xf32>
      %25 = vector.shape_cast %24 : vector<8xf32> to vector<8x1xf32>
      %26 = vector.broadcast %23 : vector<8x1xf32> to vector<8x128xf32>
      %27 = arith.subf %19, %26 : vector<8x128xf32>
      %28 = math.exp %27 : vector<8x128xf32>
      %29 = vector.broadcast %25 : vector<8x1xf32> to vector<8x128xf32>
      %30 = arith.subf %21, %29 : vector<8x128xf32>
      %31 = math.exp %30 : vector<8x128xf32>
      %cst_20 = arith.constant dense<0.000000e+00> : vector<8xf32>
      %32 = vector.multi_reduction <add>, %28, %cst_20 [1] : vector<8x128xf32> to vector<8xf32>
      %33 = vector.shape_cast %32 : vector<8xf32> to vector<8x1xf32>
      %cst_21 = arith.constant dense<0.000000e+00> : vector<8xf32>
      %34 = vector.multi_reduction <add>, %31, %cst_21 [1] : vector<8x128xf32> to vector<8xf32>
      %35 = vector.shape_cast %34 : vector<8xf32> to vector<8x1xf32>
      %36 = vector.broadcast %23 : vector<8x1xf32> to vector<8x128xf32>
      %37 = arith.subf %19, %36 : vector<8x128xf32>
      %38 = math.log %33 : vector<8x1xf32>
      %39 = vector.broadcast %38 : vector<8x1xf32> to vector<8x128xf32>
      %40 = arith.subf %37, %39 : vector<8x128xf32>
      %41 = vector.broadcast %25 : vector<8x1xf32> to vector<8x128xf32>
      %42 = arith.subf %21, %41 : vector<8x128xf32>
      %43 = math.log %35 : vector<8x1xf32>
      %44 = vector.broadcast %43 : vector<8x1xf32> to vector<8x128xf32>
      %45 = arith.subf %42, %44 : vector<8x128xf32>
      %cst_22 = arith.constant 1.000000e+00 : f32
      %46 = vector.broadcast %cst_22 : f32 to vector<8x1xf32>
      %47 = arith.divf %46, %35 : vector<8x1xf32>
      %48 = vector.broadcast %47 : vector<8x1xf32> to vector<8x128xf32>
      %49 = arith.mulf %31, %48 : vector<8x128xf32>
      %50 = arith.subf %45, %40 : vector<8x128xf32>
      %51 = arith.mulf %49, %50 : vector<8x128xf32>
      %52 = vector.shape_cast %51 : vector<8x128xf32> to vector<1x8x128xf32>
      %cst_23 = arith.constant dense<0.000000e+00> : vector<1xf32>
      %53 = vector.multi_reduction <add>, %52, %cst_23 [1, 2] : vector<1x8x128xf32> to vector<1xf32>
      %54 = vector.shape_cast %53 : vector<1xf32> to vector<1x1x1xf32>
      %55 = vector.extract %54[0, 0, 0] : f32 from vector<1x1x1xf32>
      %cst_24 = arith.constant 9.000000e+00 : f32
      %56 = arith.mulf %55, %cst_24 : f32
      %cst_25 = arith.constant 1.024000e+03 : f32
      %57 = arith.divf %56, %cst_25 : f32
      %c0_26 = arith.constant 0 : index
      %c0_27 = arith.constant 0 : index
      %58 = vector.load %arg10[%c0_26, %c0_27] : memref<1x1xf32, #tpu.memory_space<vmem>>, vector<1x1xf32>
      %cst_28 = arith.constant 5.000000e-01 : f32
      %59 = vector.broadcast %cst_28 : f32 to vector<1x1xf32>
      %60 = arith.mulf %58, %59 : vector<1x1xf32>
      %cst_29 = arith.constant 5.000000e-01 : f32
      %61 = arith.mulf %57, %cst_29 : f32
      %62 = vector.broadcast %61 : f32 to vector<1x1xf32>
      %63 = arith.addf %60, %62 : vector<1x1xf32>
      %64 = vector.shape_cast %63 : vector<1x1xf32> to vector<1x1xf32>
      %65 = vector.broadcast %64 : vector<1x1xf32> to vector<1x128xf32>
      %c0_30 = arith.constant 0 : index
      %c0_31 = arith.constant 0 : index
      %66 = vector.load %arg8[%c0_30, %c0_31] : memref<1x128xf32, #tpu.memory_space<vmem>>, vector<1x128xf32>
      tpu.vector_store %arg8[%c0_30, %c0_31], %65 {strides = array<i32>} : memref<1x128xf32, #tpu.memory_space<vmem>>, vector<1x128xf32>,
    } else {
    }
    return
  }
  func.func @transform_0(%arg0: i32) -> (i32, i32) {
    %c0_i32 = arith.constant 0 : i32
    %c0_i32_0 = arith.constant 0 : i32
    return %c0_i32, %arg0 : i32, i32
  }
  func.func @transform_1(%arg0: i32) -> (i32, i32) {
    %c0_i32 = arith.constant 0 : i32
    %c0_i32_0 = arith.constant 0 : i32
    return %arg0, %c0_i32 : i32, i32
  }
  func.func @transform_2(%arg0: i32) -> (i32, i32) {
    %c0_i32 = arith.constant 0 : i32
    %c0_i32_0 = arith.constant 0 : i32
    %c0_i32_1 = arith.constant 0 : i32
    return %c0_i32, %c0_i32_0 : i32, i32
  }
  func.func @transform_3(%arg0: i32) -> (i32, i32) {
    %c0_i32 = arith.constant 0 : i32
    %c0_i32_0 = arith.constant 0 : i32
    %c0_i32_1 = arith.constant 0 : i32
    return %c0_i32, %c0_i32_0 : i32, i32
  }
  func.func @transform_4(%arg0: i32) -> (i32, i32) {
    %c0_i32 = arith.constant 0 : i32
    %c0_i32_0 = arith.constant 0 : i32
    %c0_i32_1 = arith.constant 0 : i32
    return %c0_i32, %c0_i32_0 : i32, i32
  }
  func.func @transform_5(%arg0: i32) -> (i32, i32) {
    %c0_i32 = arith.constant 0 : i32
    %c0_i32_0 = arith.constant 0 : i32
    %c0_i32_1 = arith.constant 0 : i32
    return %c0_i32, %c0_i32_0 : i32, i32
  }
  func.func @transform_6(%arg0: i32) -> (i32, i32) {
    %c0_i32 = arith.constant 0 : i32
    %c0_i32_0 = arith.constant 0 : i32
    %c0_i32_1 = arith.constant 0 : i32
    return %c0_i32, %c0_i32_0 : i32, i32
  }
  func.func @transform_7(%arg0: i32) -> (i32, i32) {
    %c0_i32 = arith.constant 0 : i32
    %c0_i32_0 = arith.constant 0 : i32
    %c0_i32_1 = arith.constant 0 : i32
    return %c0_i32, %c0_i32_0 : i32, i32
  }
}

</mosaic_0001>

<llo_original>
// kernel: tpu_custom_call.1
$region0: #{tpu_custom_call.1}
  #allocation0 [shape = 'u32[]', space=smem, size = 0x4, offset = 0x4, fixed_abs, tag = 'smem constant byte address 0x4 - core index']
  #allocation1 [shape = 'u32[144,128]{1,0:T(1,128)}', space=vmem, size = 0x12000, scoped, tag = 'internal scratch']
  #allocation2 [shape = 'f32[8,128]{1,0:T(8,128)}', space=vmem, size = 0x1000, scoped, tag = 'scratch operand']
  #allocation3 [shape = 'f32[1,1]{1,0:T(1,128)}', space=vmem, size = 0x200, scoped, tag = 'scratch operand']
  %s0 = inlined_call_operand.hbm [shape: f32[8,1024], index: 0, kind: input, shape index: {}]
  %s1 = inlined_call_operand.hbm [shape: bf16[1024,128], index: 1, kind: input, shape index: {}]
  %s2 = inlined_call_operand.vmem [shape: f32[1,128], index: 2, kind: input, shape index: {}]
  %s3 = inlined_call_operand.vmem [shape: f32[8,128], index: 3, kind: input, shape index: {}]
  %s4 = inlined_call_operand.hbm [shape: f32[8,128], index: 4, kind: input, shape index: {}]
  %s5 = inlined_call_operand.vmem [shape: f32[8,128], index: 5, kind: input, shape index: {}]
  %s6 = inlined_call_operand.vmem [shape: f32[1,128], index: 6, kind: input, shape index: {}]
  %s7 = inlined_call_operand.hbm [shape: f32[1,128], index: 7, kind: output, shape index: {}]
  %s8 = sld [smem:[#allocation0]]
  $region58: #{tpu_custom_call.1} parent=0
    _
  %s10 = ssub.s32 1, %s8
  %s11 = scalar_select 0, %s10, %s8
  $region1: #{tpu_custom_call.1} parent=0
    #allocation4 [shape = 'u8[32768]{0}', space=vmem, size = 0x8000, scoped, tag = 'input window, operand 0, single buffered']
    #allocation5 [shape = 's32[1]{0}', space=sflag, size = 0x4, scoped, tag = 'scoped memory for tpu_custom_call.1']
    #allocation6 [shape = 's32[1]{0}', space=sflag, size = 0x4, scoped, tag = 'scoped memory for tpu_custom_call.1']
    #allocation7 [shape = 'u8[262144]{0}', space=vmem, size = 0x40000, scoped, tag = 'input window, operand 1, single buffered']
    #allocation8 [shape = 's32[1]{0}', space=sflag, size = 0x4, scoped, tag = 'scoped memory for tpu_custom_call.1']
    #allocation9 [shape = 'u8[4096]{0}', space=vmem, size = 0x1000, scoped, tag = 'input window, operand 4, single buffered']
    #allocation10 [shape = 'u8[512]{0}', space=vmem, size = 0x400, scoped, tag = 'output window, operand 0, single buffered']
    %12 = vsyncpa [#allocation5], 0
    %13 = vsyncpa [#allocation8], 0
    %14 = vsyncpa [#allocation6], 0
    // Predicated region
    $region2: #{tpu_custom_call.1} parent=1 // pred_check
      _
    $region3: #{tpu_custom_call.1} parent=1 // pred_check_branch
      %16 = sbr.rel (0) target = $region5
    $region4: #{tpu_custom_call.1} parent=1 // pred_region
      %s18 = ssub.s32 1024, 1024
      %19 = vsyncadd [#allocation5], %s18
      %s21 = sshll.u32 [#allocation4], 4
      %s22 = int_to_ptr.vmem [resolvable:$true] %s21
      %24 = dma.hbm_to_vmem [thread:$0]  %s0, 1024, %s22, [#allocation5]
    $region5: #{tpu_custom_call.1} parent=1 // pred_fallthru
      _
    // Predicated region
    $region6: #{tpu_custom_call.1} parent=1 // pred_check
      _
    $region7: #{tpu_custom_call.1} parent=1 // pred_check_branch
      %26 = sbr.rel (0) target = $region9
    $region8: #{tpu_custom_call.1} parent=1 // pred_region
      %s28 = ssub.s32 8192, 8192
      %29 = vsyncadd [#allocation8], %s28
      %s30 = sshll.u32 [#allocation7], 4
      %s31 = int_to_ptr.vmem [resolvable:$true] %s30
      %36 = dma.hbm_to_vmem [thread:$0]  %s1, 8192, %s31, [#allocation8], 64, 64, 4
    $region9: #{tpu_custom_call.1} parent=1 // pred_fallthru
      _
    // Predicated region
    $region10: #{tpu_custom_call.1} parent=1 // pred_check
      _
    $region11: #{tpu_custom_call.1} parent=1 // pred_check_branch
      %38 = sbr.rel (0) target = $region13
    $region12: #{tpu_custom_call.1} parent=1 // pred_region
      _
    $region13: #{tpu_custom_call.1} parent=1 // pred_fallthru
      _
    // Predicated region
    $region14: #{tpu_custom_call.1} parent=1 // pred_check
      _
    $region15: #{tpu_custom_call.1} parent=1 // pred_check_branch
      %40 = sbr.rel (0) target = $region17
    $region16: #{tpu_custom_call.1} parent=1 // pred_region
      _
    $region17: #{tpu_custom_call.1} parent=1 // pred_fallthru
      _
    // Predicated region
    $region18: #{tpu_custom_call.1} parent=1 // pred_check
      _
    $region19: #{tpu_custom_call.1} parent=1 // pred_check_branch
      %42 = sbr.rel (0) target = $region21
    $region20: #{tpu_custom_call.1} parent=1 // pred_region
      %s44 = ssub.s32 128, 128
      %45 = vsyncadd [#allocation8], %s44
      %s47 = sshll.u32 [#allocation9], 4
      %s48 = int_to_ptr.vmem [resolvable:$true] %s47
      %50 = dma.hbm_to_vmem [thread:$0]  %s4, 128, %s48, [#allocation8]
    $region21: #{tpu_custom_call.1} parent=1 // pred_fallthru
      _
    // Predicated region
    $region22: #{tpu_custom_call.1} parent=1 // pred_check
      _
    $region23: #{tpu_custom_call.1} parent=1 // pred_check_branch
      %52 = sbr.rel (0) target = $region25
    $region24: #{tpu_custom_call.1} parent=1 // pred_region
      _
    $region25: #{tpu_custom_call.1} parent=1 // pred_fallthru
      _
    // Predicated region
    $region26: #{tpu_custom_call.1} parent=1 // pred_check
      _
    $region27: #{tpu_custom_call.1} parent=1 // pred_check_branch
      %54 = sbr.rel (0) target = $region29
    $region28: #{tpu_custom_call.1} parent=1 // pred_region
      _
    $region29: #{tpu_custom_call.1} parent=1 // pred_fallthru
      _
    // Predicated region
    $region30: #{tpu_custom_call.1} parent=1 // pred_check
      _
    $region31: #{tpu_custom_call.1} parent=1 // pred_check_branch
      %56 = sbr.rel (0) target = $region33
    $region32: #{tpu_custom_call.1} parent=1 // pred_region
      %57 = dma.done [#allocation5], 1024
    $region33: #{tpu_custom_call.1} parent=1 // pred_fallthru
      _
    // Predicated region
    $region34: #{tpu_custom_call.1} parent=1 // pred_check
      _
    $region35: #{tpu_custom_call.1} parent=1 // pred_check_branch
      %59 = sbr.rel (0) target = $region37
    $region36: #{tpu_custom_call.1} parent=1 // pred_region
      %60 = dma.done [#allocation8], 8192
    $region37: #{tpu_custom_call.1} parent=1 // pred_fallthru
      _
    // Predicated region
    $region38: #{tpu_custom_call.1} parent=1 // pred_check
      _
    $region39: #{tpu_custom_call.1} parent=1 // pred_check_branch
      %62 = sbr.rel (0) target = $region41
    $region40: #{tpu_custom_call.1} parent=1 // pred_region
      %63 = dma.done [#allocation8], 128
    $region41: #{tpu_custom_call.1} parent=1 // pred_fallthru
      _
    %p65 = scmp.eq.s32.totalorder 0, 0
    // Predicated region
    $region42: #{tpu_custom_call.1} parent=1 // pred_check
      %p66 = pneg %p65
    $region43: #{tpu_custom_call.1} parent=1 // pred_check_branch
      %68 = sbr.rel (%p66) target = $region45
    $region44: #{tpu_custom_call.1} parent=1 // pred_region
      %69 = vst [vmem:[#allocation2] sm:$0xff] 0.0
      %v70 = vld [vmem:[%s3] sm:$0xff]
      %v71 = vld [vmem:[%s5] sm:$0xff]
      %v72 = vld [vmem:[%s6] sm:$0x1]
      %v74 = vlaneseq
      %v75 = vshrl.u32 %v74, 7
      %v76 = vsub.s32 0, %v75
      %v77 = vrot.slane %v72, %v76
      %v79 = vadd.f32 %v70, %v77
      %80 = vmax.xlane.f32.xlu0 %v79
      %v81 = vpop.xlane.xlu0 %80
      %v82 = vsub.f32 %v79, %v81
      %v83 = vmul.f32 %v82, 1.442695
      %v84 = vpow.pop %v83
      %85 = vadd.xlane.f32.xlu0 %v84
      %v86 = vpop.xlane.xlu0 %85
      %v87 = vlog2.pop %v86
      %v88 = vmul.f32 %v87, 0.6931472
      %v89 = vadd.f32 %v81, %v88
      %v90 = vsub.f32 0.0, %v71
      %v91 = vsub.f32 %v79, %v89
      %v92 = vmul.f32 %v90, %v91
      %93 = vadd.xlane.f32.xlu0 %v92
      %v94 = vpop.xlane.xlu0 %93
      %v95 = vrot.slane %v94, 4
      %v96 = vadd.f32 %v94, %v95
      %v97 = vrot.slane %v96, 2
      %v98 = vadd.f32 %v96, %v97
      %v99 = vrot.slane %v98, 1
      %v100 = vadd.f32 %v98, %v99
      %v101 = vrcp.pop 8.0
      %v102 = vmul.f32 %v100, %v101
      %vm103 = vcmask 0
      %104 = vst.msk [vmem:[#allocation3] sm:$0x1] %vm103, %v102
    $region45: #{tpu_custom_call.1} parent=1 // pred_fallthru
      _
    %v105 = vld [vmem:[#allocation2] sm:$0xff]
    %v106 = vld [vmem:[#allocation4] sm:$0xff]
    %v107 = vld [vmem:[#allocation4 + $0x8] sm:$0xff]
    %v108 = vld [vmem:[#allocation4 + $0x10] sm:$0xff]
    %v109 = vld [vmem:[#allocation4 + $0x18] sm:$0xff]
    %v110 = vld [vmem:[#allocation4 + $0x20] sm:$0xff]
    %v111 = vld [vmem:[#allocation4 + $0x28] sm:$0xff]
    %v112 = vld [vmem:[#allocation4 + $0x30] sm:$0xff]
    %v113 = vld [vmem:[#allocation4 + $0x38] sm:$0xff]
    %v114 = vpack.c.bf16 %v106, %v106
    %v115 = vpack.c.bf16 %v107, %v107
    %v116 = vpack.c.bf16 %v108, %v108
    %v117 = vpack.c.bf16 %v109, %v109
    %v118 = vpack.c.bf16 %v110, %v110
    %v119 = vpack.c.bf16 %v111, %v111
    %v120 = vpack.c.bf16 %v112, %v112
    %v121 = vpack.c.bf16 %v113, %v113
    %v122 = vld [vmem:[#allocation7] sm:$0xf]
    %v123 = vld [vmem:[#allocation7 + $0x4] sm:$0xf]
    %v124 = vld [vmem:[#allocation7 + $0x8] sm:$0xf]
    %v125 = vld [vmem:[#allocation7 + $0xc] sm:$0xf]
    %v126 = vld [vmem:[#allocation7 + $0x10] sm:$0xf]
    %v127 = vld [vmem:[#allocation7 + $0x14] sm:$0xf]
    %v128 = vld [vmem:[#allocation7 + $0x18] sm:$0xf]
    %v129 = vld [vmem:[#allocation7 + $0x1c] sm:$0xf]
    %v130 = vld [vmem:[#allocation7 + $0x20] sm:$0xf]
    %v131 = vld [vmem:[#allocation7 + $0x24] sm:$0xf]
    %v132 = vld [vmem:[#allocation7 + $0x28] sm:$0xf]
    %v133 = vld [vmem:[#allocation7 + $0x2c] sm:$0xf]
    %v134 = vld [vmem:[#allocation7 + $0x30] sm:$0xf]
    %v135 = vld [vmem:[#allocation7 + $0x34] sm:$0xf]
    %v136 = vld [vmem:[#allocation7 + $0x38] sm:$0xf]
    %v137 = vld [vmem:[#allocation7 + $0x3c] sm:$0xf]
    %v138 = vld [vmem:[#allocation7 + $0x40] sm:$0xf]
    %v139 = vld [vmem:[#allocation7 + $0x44] sm:$0xf]
    %v140 = vld [vmem:[#allocation7 + $0x48] sm:$0xf]
    %v141 = vld [vmem:[#allocation7 + $0x4c] sm:$0xf]
    %v142 = vld [vmem:[#allocation7 + $0x50] sm:$0xf]
    %v143 = vld [vmem:[#allocation7 + $0x54] sm:$0xf]
    %v144 = vld [vmem:[#allocation7 + $0x58] sm:$0xf]
    %v145 = vld [vmem:[#allocation7 + $0x5c] sm:$0xf]
    %v146 = vld [vmem:[#allocation7 + $0x60] sm:$0xf]
    %v147 = vld [vmem:[#allocation7 + $0x64] sm:$0xf]
    %v148 = vld [vmem:[#allocation7 + $0x68] sm:$0xf]
    %v149 = vld [vmem:[#allocation7 + $0x6c] sm:$0xf]
    %v150 = vld [vmem:[#allocation7 + $0x70] sm:$0xf]
    %v151 = vld [vmem:[#allocation7 + $0x74] sm:$0xf]
    %v152 = vld [vmem:[#allocation7 + $0x78] sm:$0xf]
    %v153 = vld [vmem:[#allocation7 + $0x7c] sm:$0xf]
    %v154 = vld [vmem:[#allocation7 + $0x80] sm:$0xf]
    %v155 = vld [vmem:[#allocation7 + $0x84] sm:$0xf]
    %v156 = vld [vmem:[#allocation7 + $0x88] sm:$0xf]
    %v157 = vld [vmem:[#allocation7 + $0x8c] sm:$0xf]
    %v158 = vld [vmem:[#allocation7 + $0x90] sm:$0xf]
    %v159 = vld [vmem:[#allocation7 + $0x94] sm:$0xf]
    %v160 = vld [vmem:[#allocation7 + $0x98] sm:$0xf]
    %v161 = vld [vmem:[#allocation7 + $0x9c] sm:$0xf]
    %v162 = vld [vmem:[#allocation7 + $0xa0] sm:$0xf]
    %v163 = vld [vmem:[#allocation7 + $0xa4] sm:$0xf]
    %v164 = vld [vmem:[#allocation7 + $0xa8] sm:$0xf]
    %v165 = vld [vmem:[#allocation7 + $0xac] sm:$0xf]
    %v166 = vld [vmem:[#allocation7 + $0xb0] sm:$0xf]
    %v167 = vld [vmem:[#allocation7 + $0xb4] sm:$0xf]
    %v168 = vld [vmem:[#allocation7 + $0xb8] sm:$0xf]
    %v169 = vld [vmem:[#allocation7 + $0xbc] sm:$0xf]
    %v170 = vld [vmem:[#allocation7 + $0xc0] sm:$0xf]
    %v171 = vld [vmem:[#allocation7 + $0xc4] sm:$0xf]
    %v172 = vld [vmem:[#allocation7 + $0xc8] sm:$0xf]
    %v173 = vld [vmem:[#allocation7 + $0xcc] sm:$0xf]
    %v174 = vld [vmem:[#allocation7 + $0xd0] sm:$0xf]
    %v175 = vld [vmem:[#allocation7 + $0xd4] sm:$0xf]
    %v176 = vld [vmem:[#allocation7 + $0xd8] sm:$0xf]
    %v177 = vld [vmem:[#allocation7 + $0xdc] sm:$0xf]
    %v178 = vld [vmem:[#allocation7 + $0xe0] sm:$0xf]
    %v179 = vld [vmem:[#allocation7 + $0xe4] sm:$0xf]
    %v180 = vld [vmem:[#allocation7 + $0xe8] sm:$0xf]
    %v181 = vld [vmem:[#allocation7 + $0xec] sm:$0xf]
    %v182 = vld [vmem:[#allocation7 + $0xf0] sm:$0xf]
    %v183 = vld [vmem:[#allocation7 + $0xf4] sm:$0xf]
    %v184 = vld [vmem:[#allocation7 + $0xf8] sm:$0xf]
    %v185 = vld [vmem:[#allocation7 + $0xfc] sm:$0xf]
    %v186 = vld [vmem:[#allocation7 + $0x100] sm:$0xf]
    %v187 = vld [vmem:[#allocation7 + $0x104] sm:$0xf]
    %v188 = vld [vmem:[#allocation7 + $0x108] sm:$0xf]
    %v189 = vld [vmem:[#allocation7 + $0x10c] sm:$0xf]
    %v190 = vld [vmem:[#allocation7 + $0x110] sm:$0xf]
    %v191 = vld [vmem:[#allocation7 + $0x114] sm:$0xf]
    %v192 = vld [vmem:[#allocation7 + $0x118] sm:$0xf]
    %v193 = vld [vmem:[#allocation7 + $0x11c] sm:$0xf]
    %v194 = vld [vmem:[#allocation7 + $0x120] sm:$0xf]
    %v195 = vld [vmem:[#allocation7 + $0x124] sm:$0xf]
    %v196 = vld [vmem:[#allocation7 + $0x128] sm:$0xf]
    %v197 = vld [vmem:[#allocation7 + $0x12c] sm:$0xf]
    %v198 = vld [vmem:[#allocation7 + $0x130] sm:$0xf]
    %v199 = vld [vmem:[#allocation7 + $0x134] sm:$0xf]
    %v200 = vld [vmem:[#allocation7 + $0x138] sm:$0xf]
    %v201 = vld [vmem:[#allocation7 + $0x13c] sm:$0xf]
    %v202 = vld [vmem:[#allocation7 + $0x140] sm:$0xf]
    %v203 = vld [vmem:[#allocation7 + $0x144] sm:$0xf]
    %v204 = vld [vmem:[#allocation7 + $0x148] sm:$0xf]
    %v205 = vld [vmem:[#allocation7 + $0x14c] sm:$0xf]
    %v206 = vld [vmem:[#allocation7 + $0x150] sm:$0xf]
    %v207 = vld [vmem:[#allocation7 + $0x154] sm:$0xf]
    %v208 = vld [vmem:[#allocation7 + $0x158] sm:$0xf]
    %v209 = vld [vmem:[#allocation7 + $0x15c] sm:$0xf]
    %v210 = vld [vmem:[#allocation7 + $0x160] sm:$0xf]
    %v211 = vld [vmem:[#allocation7 + $0x164] sm:$0xf]
    %v212 = vld [vmem:[#allocation7 + $0x168] sm:$0xf]
    %v213 = vld [vmem:[#allocation7 + $0x16c] sm:$0xf]
    %v214 = vld [vmem:[#allocation7 + $0x170] sm:$0xf]
    %v215 = vld [vmem:[#allocation7 + $0x174] sm:$0xf]
    %v216 = vld [vmem:[#allocation7 + $0x178] sm:$0xf]
    %v217 = vld [vmem:[#allocation7 + $0x17c] sm:$0xf]
    %v218 = vld [vmem:[#allocation7 + $0x180] sm:$0xf]
    %v219 = vld [vmem:[#allocation7 + $0x184] sm:$0xf]
    %v220 = vld [vmem:[#allocation7 + $0x188] sm:$0xf]
    %v221 = vld [vmem:[#allocation7 + $0x18c] sm:$0xf]
    %v222 = vld [vmem:[#allocation7 + $0x190] sm:$0xf]
    %v223 = vld [vmem:[#allocation7 + $0x194] sm:$0xf]
    %v224 = vld [vmem:[#allocation7 + $0x198] sm:$0xf]
    %v225 = vld [vmem:[#allocation7 + $0x19c] sm:$0xf]
    %v226 = vld [vmem:[#allocation7 + $0x1a0] sm:$0xf]
    %v227 = vld [vmem:[#allocation7 + $0x1a4] sm:$0xf]
    %v228 = vld [vmem:[#allocation7 + $0x1a8] sm:$0xf]
    %v229 = vld [vmem:[#allocation7 + $0x1ac] sm:$0xf]
    %v230 = vld [vmem:[#allocation7 + $0x1b0] sm:$0xf]
    %v231 = vld [vmem:[#allocation7 + $0x1b4] sm:$0xf]
    %v232 = vld [vmem:[#allocation7 + $0x1b8] sm:$0xf]
    %v233 = vld [vmem:[#allocation7 + $0x1bc] sm:$0xf]
    %v234 = vld [vmem:[#allocation7 + $0x1c0] sm:$0xf]
    %v235 = vld [vmem:[#allocation7 + $0x1c4] sm:$0xf]
    %v236 = vld [vmem:[#allocation7 + $0x1c8] sm:$0xf]
    %v237 = vld [vmem:[#allocation7 + $0x1cc] sm:$0xf]
    %v238 = vld [vmem:[#allocation7 + $0x1d0] sm:$0xf]
    %v239 = vld [vmem:[#allocation7 + $0x1d4] sm:$0xf]
    %v240 = vld [vmem:[#allocation7 + $0x1d8] sm:$0xf]
    %v241 = vld [vmem:[#allocation7 + $0x1dc] sm:$0xf]
    %v242 = vld [vmem:[#allocation7 + $0x1e0] sm:$0xf]
    %v243 = vld [vmem:[#allocation7 + $0x1e4] sm:$0xf]
    %v244 = vld [vmem:[#allocation7 + $0x1e8] sm:$0xf]
    %v245 = vld [vmem:[#allocation7 + $0x1ec] sm:$0xf]
    %v246 = vld [vmem:[#allocation7 + $0x1f0] sm:$0xf]
    %v247 = vld [vmem:[#allocation7 + $0x1f4] sm:$0xf]
    %v248 = vld [vmem:[#allocation7 + $0x1f8] sm:$0xf]
    %v249 = vld [vmem:[#allocation7 + $0x1fc] sm:$0xf]
    %v378 = vunpack.c.l.b16 %v122
    %v379 = vunpack.c.l.b16 %v123
    %v380 = vunpack.c.l.b16 %v124
    %v381 = vunpack.c.l.b16 %v125
    %v382 = vunpack.c.l.b16 %v126
    %v383 = vunpack.c.l.b16 %v127
    %v384 = vunpack.c.l.b16 %v128
    %v385 = vunpack.c.l.b16 %v129
    %v386 = vunpack.c.l.b16 %v130
    %v387 = vunpack.c.l.b16 %v131
    %v388 = vunpack.c.l.b16 %v132
    %v389 = vunpack.c.l.b16 %v133
    %v390 = vunpack.c.l.b16 %v134
    %v391 = vunpack.c.l.b16 %v135
    %v392 = vunpack.c.l.b16 %v136
    %v393 = vunpack.c.l.b16 %v137
    %v394 = vunpack.c.l.b16 %v138
    %v395 = vunpack.c.l.b16 %v139
    %v396 = vunpack.c.l.b16 %v140
    %v397 = vunpack.c.l.b16 %v141
    %v398 = vunpack.c.l.b16 %v142
    %v399 = vunpack.c.l.b16 %v143
    %v400 = vunpack.c.l.b16 %v144
    %v401 = vunpack.c.l.b16 %v145
    %v402 = vunpack.c.l.b16 %v146
    %v403 = vunpack.c.l.b16 %v147
    %v404 = vunpack.c.l.b16 %v148
    %v405 = vunpack.c.l.b16 %v149
    %v406 = vunpack.c.l.b16 %v150
    %v407 = vunpack.c.l.b16 %v151
    %v408 = vunpack.c.l.b16 %v152
    %v409 = vunpack.c.l.b16 %v153
    %v410 = vunpack.c.l.b16 %v154
    %v411 = vunpack.c.l.b16 %v155
    %v412 = vunpack.c.l.b16 %v156
    %v413 = vunpack.c.l.b16 %v157
    %v414 = vunpack.c.l.b16 %v158
    %v415 = vunpack.c.l.b16 %v159
    %v416 = vunpack.c.l.b16 %v160
    %v417 = vunpack.c.l.b16 %v161
    %v418 = vunpack.c.l.b16 %v162
    %v419 = vunpack.c.l.b16 %v163
    %v420 = vunpack.c.l.b16 %v164
    %v421 = vunpack.c.l.b16 %v165
    %v422 = vunpack.c.l.b16 %v166
    %v423 = vunpack.c.l.b16 %v167
    %v424 = vunpack.c.l.b16 %v168
    %v425 = vunpack.c.l.b16 %v169
    %v426 = vunpack.c.l.b16 %v170
    %v427 = vunpack.c.l.b16 %v171
    %v428 = vunpack.c.l.b16 %v172
    %v429 = vunpack.c.l.b16 %v173
    %v430 = vunpack.c.l.b16 %v174
    %v431 = vunpack.c.l.b16 %v175
    %v432 = vunpack.c.l.b16 %v176
    %v433 = vunpack.c.l.b16 %v177
    %v434 = vunpack.c.l.b16 %v178
    %v435 = vunpack.c.l.b16 %v179
    %v436 = vunpack.c.l.b16 %v180
    %v437 = vunpack.c.l.b16 %v181
    %v438 = vunpack.c.l.b16 %v182
    %v439 = vunpack.c.l.b16 %v183
    %v440 = vunpack.c.l.b16 %v184
    %v441 = vunpack.c.l.b16 %v185
    %v442 = vunpack.c.l.b16 %v186
    %v443 = vunpack.c.l.b16 %v187
    %v444 = vunpack.c.l.b16 %v188
    %v445 = vunpack.c.l.b16 %v189
    %v446 = vunpack.c.l.b16 %v190
    %v447 = vunpack.c.l.b16 %v191
    %v448 = vunpack.c.l.b16 %v192
    %v449 = vunpack.c.l.b16 %v193
    %v450 = vunpack.c.l.b16 %v194
    %v451 = vunpack.c.l.b16 %v195
    %v452 = vunpack.c.l.b16 %v196
    %v453 = vunpack.c.l.b16 %v197
    %v454 = vunpack.c.l.b16 %v198
    %v455 = vunpack.c.l.b16 %v199
    %v456 = vunpack.c.l.b16 %v200
    %v457 = vunpack.c.l.b16 %v201
    %v458 = vunpack.c.l.b16 %v202
    %v459 = vunpack.c.l.b16 %v203
    %v460 = vunpack.c.l.b16 %v204
    %v461 = vunpack.c.l.b16 %v205
    %v462 = vunpack.c.l.b16 %v206
    %v463 = vunpack.c.l.b16 %v207
    %v464 = vunpack.c.l.b16 %v208
    %v465 = vunpack.c.l.b16 %v209
    %v466 = vunpack.c.l.b16 %v210
    %v467 = vunpack.c.l.b16 %v211
    %v468 = vunpack.c.l.b16 %v212
    %v469 = vunpack.c.l.b16 %v213
    %v470 = vunpack.c.l.b16 %v214
    %v471 = vunpack.c.l.b16 %v215
    %v472 = vunpack.c.l.b16 %v216
    %v473 = vunpack.c.l.b16 %v217
    %v474 = vunpack.c.l.b16 %v218
    %v475 = vunpack.c.l.b16 %v219
    %v476 = vunpack.c.l.b16 %v220
    %v477 = vunpack.c.l.b16 %v221
    %v478 = vunpack.c.l.b16 %v222
    %v479 = vunpack.c.l.b16 %v223
    %v480 = vunpack.c.l.b16 %v224
    %v481 = vunpack.c.l.b16 %v225
    %v482 = vunpack.c.l.b16 %v226
    %v483 = vunpack.c.l.b16 %v227
    %v484 = vunpack.c.l.b16 %v228
    %v485 = vunpack.c.l.b16 %v229
    %v486 = vunpack.c.l.b16 %v230
    %v487 = vunpack.c.l.b16 %v231
    %v488 = vunpack.c.l.b16 %v232
    %v489 = vunpack.c.l.b16 %v233
    %v490 = vunpack.c.l.b16 %v234
    %v491 = vunpack.c.l.b16 %v235
    %v492 = vunpack.c.l.b16 %v236
    %v493 = vunpack.c.l.b16 %v237
    %v494 = vunpack.c.l.b16 %v238
    %v495 = vunpack.c.l.b16 %v239
    %v496 = vunpack.c.l.b16 %v240
    %v497 = vunpack.c.l.b16 %v241
    %v498 = vunpack.c.l.b16 %v242
    %v499 = vunpack.c.l.b16 %v243
    %v500 = vunpack.c.l.b16 %v244
    %v501 = vunpack.c.l.b16 %v245
    %v502 = vunpack.c.l.b16 %v246
    %v503 = vunpack.c.l.b16 %v247
    %v504 = vunpack.c.l.b16 %v248
    %v505 = vunpack.c.l.b16 %v249
    %v506 = vpack.c.b16 %v379, %v378
    %v507 = vpack.c.b16 %v381, %v380
    %v508 = vpack.c.b16 %v383, %v382
    %v509 = vpack.c.b16 %v385, %v384
    %v510 = vpack.c.b16 %v387, %v386
    %v511 = vpack.c.b16 %v389, %v388
    %v512 = vpack.c.b16 %v391, %v390
    %v513 = vpack.c.b16 %v393, %v392
    %v514 = vpack.c.b16 %v395, %v394
    %v515 = vpack.c.b16 %v397, %v396
    %v516 = vpack.c.b16 %v399, %v398
    %v517 = vpack.c.b16 %v401, %v400
    %v518 = vpack.c.b16 %v403, %v402
    %v519 = vpack.c.b16 %v405, %v404
    %v520 = vpack.c.b16 %v407, %v406
    %v521 = vpack.c.b16 %v409, %v408
    %v522 = vpack.c.b16 %v411, %v410
    %v523 = vpack.c.b16 %v413, %v412
    %v524 = vpack.c.b16 %v415, %v414
    %v525 = vpack.c.b16 %v417, %v416
    %v526 = vpack.c.b16 %v419, %v418
    %v527 = vpack.c.b16 %v421, %v420
    %v528 = vpack.c.b16 %v423, %v422
    %v529 = vpack.c.b16 %v425, %v424
    %v530 = vpack.c.b16 %v427, %v426
    %v531 = vpack.c.b16 %v429, %v428
    %v532 = vpack.c.b16 %v431, %v430
    %v533 = vpack.c.b16 %v433, %v432
    %v534 = vpack.c.b16 %v435, %v434
    %v535 = vpack.c.b16 %v437, %v436
    %v536 = vpack.c.b16 %v439, %v438
    %v537 = vpack.c.b16 %v441, %v440
    %v538 = vpack.c.b16 %v443, %v442
    %v539 = vpack.c.b16 %v445, %v444
    %v540 = vpack.c.b16 %v447, %v446
    %v541 = vpack.c.b16 %v449, %v448
    %v542 = vpack.c.b16 %v451, %v450
    %v543 = vpack.c.b16 %v453, %v452
    %v544 = vpack.c.b16 %v455, %v454
    %v545 = vpack.c.b16 %v457, %v456
    %v546 = vpack.c.b16 %v459, %v458
    %v547 = vpack.c.b16 %v461, %v460
    %v548 = vpack.c.b16 %v463, %v462
    %v549 = vpack.c.b16 %v465, %v464
    %v550 = vpack.c.b16 %v467, %v466
    %v551 = vpack.c.b16 %v469, %v468
    %v552 = vpack.c.b16 %v471, %v470
    %v553 = vpack.c.b16 %v473, %v472
    %v554 = vpack.c.b16 %v475, %v474
    %v555 = vpack.c.b16 %v477, %v476
    %v556 = vpack.c.b16 %v479, %v478
    %v557 = vpack.c.b16 %v481, %v480
    %v558 = vpack.c.b16 %v483, %v482
    %v559 = vpack.c.b16 %v485, %v484
    %v560 = vpack.c.b16 %v487, %v486
    %v561 = vpack.c.b16 %v489, %v488
    %v562 = vpack.c.b16 %v491, %v490
    %v563 = vpack.c.b16 %v493, %v492
    %v564 = vpack.c.b16 %v495, %v494
    %v565 = vpack.c.b16 %v497, %v496
    %v566 = vpack.c.b16 %v499, %v498
    %v567 = vpack.c.b16 %v501, %v500
    %v568 = vpack.c.b16 %v503, %v502
    %v569 = vpack.c.b16 %v505, %v504
    %634 = vmatprep.subr.bf16.mxu0 0
    %635 = vmatpush1.bf16.msra.mxu0 %v506
    %636 = vmatprep.subr.bf16.mxu0 0
    %637 = vmatpush1.bf16.msra.mxu0 %v507
    %638 = vmatprep.subr.bf16.mxu0 0
    %639 = vmatpush1.bf16.msra.mxu0 %v508
    %640 = vmatprep.subr.bf16.mxu0 0
    %641 = vmatpush1.bf16.msra.mxu0 %v509
    %642 = vmatprep.subr.bf16.mxu0 0
    %643 = vmatpush1.bf16.msra.mxu0 %v510
    %644 = vmatprep.subr.bf16.mxu0 0
    %645 = vmatpush1.bf16.msra.mxu0 %v511
    %646 = vmatprep.subr.bf16.mxu0 0
    %647 = vmatpush1.bf16.msra.mxu0 %v512
    %648 = vmatprep.subr.bf16.mxu0 0
    %649 = vmatpush1.bf16.msra.mxu0 %v513
    %650 = vmatprep.subr.bf16.mxu0 0
    %651 = vmatpush1.bf16.msra.mxu0 %v514
    %652 = vmatprep.subr.bf16.mxu0 0
    %653 = vmatpush1.bf16.msra.mxu0 %v515
    %654 = vmatprep.subr.bf16.mxu0 0
    %655 = vmatpush1.bf16.msra.mxu0 %v516
    %656 = vmatprep.subr.bf16.mxu0 0
    %657 = vmatpush1.bf16.msra.mxu0 %v517
    %658 = vmatprep.subr.bf16.mxu0 0
    %659 = vmatpush1.bf16.msra.mxu0 %v518
    %660 = vmatprep.subr.bf16.mxu0 0
    %661 = vmatpush1.bf16.msra.mxu0 %v519
    %662 = vmatprep.subr.bf16.mxu0 0
    %663 = vmatpush1.bf16.msra.mxu0 %v520
    %664 = vmatprep.subr.bf16.mxu0 0
    %665 = vmatpush1.bf16.msra.mxu0 %v521
    %666 = vmatprep.mubr.bf16.mxu0 %v115
    %667 = vmatmul.mubr.bf16.gmra.mrb[0].mxu0 %v114
    %v668 = vpop.f32.mrb[0].mxu0
    %v669 = vadd.f32 0.0, %v668
    %v670 = vpop.f32.mrb[0].mxu0
    %v671 = vpop.f32.mrb[0].mxu0
    %v672 = vpop.f32.mrb[0].mxu0
    %673 = vdwg.mxu0
    %674 = vmatprep.subr.bf16.mxu0 0
    %675 = vmatpush1.bf16.msra.mxu0 %v522
    %676 = vmatprep.subr.bf16.mxu0 0
    %677 = vmatpush1.bf16.msra.mxu0 %v523
    %678 = vmatprep.subr.bf16.mxu0 0
    %679 = vmatpush1.bf16.msra.mxu0 %v524
    %680 = vmatprep.subr.bf16.mxu0 0
    %681 = vmatpush1.bf16.msra.mxu0 %v525
    %682 = vmatprep.subr.bf16.mxu0 0
    %683 = vmatpush1.bf16.msra.mxu0 %v526
    %684 = vmatprep.subr.bf16.mxu0 0
    %685 = vmatpush1.bf16.msra.mxu0 %v527
    %686 = vmatprep.subr.bf16.mxu0 0
    %687 = vmatpush1.bf16.msra.mxu0 %v528
    %688 = vmatprep.subr.bf16.mxu0 0
    %689 = vmatpush1.bf16.msra.mxu0 %v529
    %690 = vmatprep.subr.bf16.mxu0 0
    %691 = vmatpush1.bf16.msra.mxu0 %v530
    %692 = vmatprep.subr.bf16.mxu0 0
    %693 = vmatpush1.bf16.msra.mxu0 %v531
    %694 = vmatprep.subr.bf16.mxu0 0
    %695 = vmatpush1.bf16.msra.mxu0 %v532
    %696 = vmatprep.subr.bf16.mxu0 0
    %697 = vmatpush1.bf16.msra.mxu0 %v533
    %698 = vmatprep.subr.bf16.mxu0 0
    %699 = vmatpush1.bf16.msra.mxu0 %v534
    %700 = vmatprep.subr.bf16.mxu0 0
    %701 = vmatpush1.bf16.msra.mxu0 %v535
    %702 = vmatprep.subr.bf16.mxu0 0
    %703 = vmatpush1.bf16.msra.mxu0 %v536
    %704 = vmatprep.subr.bf16.mxu0 0
    %705 = vmatpush1.bf16.msra.mxu0 %v537
    %706 = vmatprep.mubr.bf16.mxu0 %v117
    %707 = vmatmul.mubr.bf16.gmra.mrb[0].mxu0 %v116
    %v708 = vpop.f32.mrb[0].mxu0
    %v709 = vadd.f32 %v669, %v708
    %v710 = vpop.f32.mrb[0].mxu0
    %v711 = vpop.f32.mrb[0].mxu0
    %v712 = vpop.f32.mrb[0].mxu0
    %713 = vdwg.mxu0
    %714 = vmatprep.subr.bf16.mxu0 0
    %715 = vmatpush1.bf16.msra.mxu0 %v538
    %716 = vmatprep.subr.bf16.mxu0 0
    %717 = vmatpush1.bf16.msra.mxu0 %v539
    %718 = vmatprep.subr.bf16.mxu0 0
    %719 = vmatpush1.bf16.msra.mxu0 %v540
    %720 = vmatprep.subr.bf16.mxu0 0
    %721 = vmatpush1.bf16.msra.mxu0 %v541
    %722 = vmatprep.subr.bf16.mxu0 0
    %723 = vmatpush1.bf16.msra.mxu0 %v542
    %724 = vmatprep.subr.bf16.mxu0 0
    %725 = vmatpush1.bf16.msra.mxu0 %v543
    %726 = vmatprep.subr.bf16.mxu0 0
    %727 = vmatpush1.bf16.msra.mxu0 %v544
    %728 = vmatprep.subr.bf16.mxu0 0
    %729 = vmatpush1.bf16.msra.mxu0 %v545
    %730 = vmatprep.subr.bf16.mxu0 0
    %731 = vmatpush1.bf16.msra.mxu0 %v546
    %732 = vmatprep.subr.bf16.mxu0 0
    %733 = vmatpush1.bf16.msra.mxu0 %v547
    %734 = vmatprep.subr.bf16.mxu0 0
    %735 = vmatpush1.bf16.msra.mxu0 %v548
    %736 = vmatprep.subr.bf16.mxu0 0
    %737 = vmatpush1.bf16.msra.mxu0 %v549
    %738 = vmatprep.subr.bf16.mxu0 0
    %739 = vmatpush1.bf16.msra.mxu0 %v550
    %740 = vmatprep.subr.bf16.mxu0 0
    %741 = vmatpush1.bf16.msra.mxu0 %v551
    %742 = vmatprep.subr.bf16.mxu0 0
    %743 = vmatpush1.bf16.msra.mxu0 %v552
    %744 = vmatprep.subr.bf16.mxu0 0
    %745 = vmatpush1.bf16.msra.mxu0 %v553
    %746 = vmatprep.mubr.bf16.mxu0 %v119
    %747 = vmatmul.mubr.bf16.gmra.mrb[0].mxu0 %v118
    %v748 = vpop.f32.mrb[0].mxu0
    %v749 = vadd.f32 %v709, %v748
    %v750 = vpop.f32.mrb[0].mxu0
    %v751 = vpop.f32.mrb[0].mxu0
    %v752 = vpop.f32.mrb[0].mxu0
    %753 = vdwg.mxu0
    %754 = vmatprep.subr.bf16.mxu0 0
    %755 = vmatpush1.bf16.msra.mxu0 %v554
    %756 = vmatprep.subr.bf16.mxu0 0
    %757 = vmatpush1.bf16.msra.mxu0 %v555
    %758 = vmatprep.subr.bf16.mxu0 0
    %759 = vmatpush1.bf16.msra.mxu0 %v556
    %760 = vmatprep.subr.bf16.mxu0 0
    %761 = vmatpush1.bf16.msra.mxu0 %v557
    %762 = vmatprep.subr.bf16.mxu0 0
    %763 = vmatpush1.bf16.msra.mxu0 %v558
    %764 = vmatprep.subr.bf16.mxu0 0
    %765 = vmatpush1.bf16.msra.mxu0 %v559
    %766 = vmatprep.subr.bf16.mxu0 0
    %767 = vmatpush1.bf16.msra.mxu0 %v560
    %768 = vmatprep.subr.bf16.mxu0 0
    %769 = vmatpush1.bf16.msra.mxu0 %v561
    %770 = vmatprep.subr.bf16.mxu0 0
    %771 = vmatpush1.bf16.msra.mxu0 %v562
    %772 = vmatprep.subr.bf16.mxu0 0
    %773 = vmatpush1.bf16.msra.mxu0 %v563
    %774 = vmatprep.subr.bf16.mxu0 0
    %775 = vmatpush1.bf16.msra.mxu0 %v564
    %776 = vmatprep.subr.bf16.mxu0 0
    %777 = vmatpush1.bf16.msra.mxu0 %v565
    %778 = vmatprep.subr.bf16.mxu0 0
    %779 = vmatpush1.bf16.msra.mxu0 %v566
    %780 = vmatprep.subr.bf16.mxu0 0
    %781 = vmatpush1.bf16.msra.mxu0 %v567
    %782 = vmatprep.subr.bf16.mxu0 0
    %783 = vmatpush1.bf16.msra.mxu0 %v568
    %784 = vmatprep.subr.bf16.mxu0 0
    %785 = vmatpush1.bf16.msra.mxu0 %v569
    %786 = vmatprep.mubr.bf16.mxu0 %v121
    %787 = vmatmul.mubr.bf16.gmra.mrb[0].mxu0 %v120
    %v788 = vpop.f32.mrb[0].mxu0
    %v789 = vadd.f32 %v749, %v788
    %v790 = vpop.f32.mrb[0].mxu0
    %v791 = vpop.f32.mrb[0].mxu0
    %v792 = vpop.f32.mrb[0].mxu0
    %793 = vdwg.mxu0
    %v794 = vadd.f32 %v105, %v789
    %795 = vst [vmem:[#allocation2] sm:$0xff] %v794
    // Predicated region
    $region46: #{tpu_custom_call.1} parent=1 // pred_check
      %p796 = pneg %p65
    $region47: #{tpu_custom_call.1} parent=1 // pred_check_branch
      %798 = sbr.rel (%p796) target = $region49
    $region48: #{tpu_custom_call.1} parent=1 // pred_region
      %v799 = vld [vmem:[#allocation2] sm:$0xff]
      %v800 = vld [vmem:[%s2] sm:$0x1]
      %v802 = vlaneseq
      %v803 = vshrl.u32 %v802, 7
      %v804 = vsub.s32 0, %v803
      %v805 = vrot.slane %v800, %v804
      %v807 = vadd.f32 %v799, %v805
      %v808 = vld [vmem:[#allocation9] sm:$0xff]
      %v809 = vmul.f32 %v808, 0.33333334
      %v810 = vmul.f32 %v807, 0.33333334
      %811 = vmax.xlane.f32.xlu0 %v809
      %v812 = vpop.xlane.xlu0 %811
      %813 = vmax.xlane.f32.xlu0 %v810
      %v814 = vpop.xlane.xlu0 %813
      %v815 = vsub.f32 %v809, %v812
      %v816 = vmul.f32 %v815, 1.442695
      %v817 = vpow.pop %v816
      %v818 = vsub.f32 %v810, %v814
      %v819 = vmul.f32 %v818, 1.442695
      %v820 = vpow.pop %v819
      %821 = vadd.xlane.f32.xlu0 %v817
      %v822 = vpop.xlane.xlu0 %821
      %823 = vadd.xlane.f32.xlu0 %v820
      %v824 = vpop.xlane.xlu0 %823
      %v825 = vlog2.pop %v822
      %v826 = vmul.f32 %v825, 0.6931472
      %v827 = vsub.f32 %v815, %v826
      %v828 = vlog2.pop %v824
      %v829 = vmul.f32 %v828, 0.6931472
      %v830 = vsub.f32 %v818, %v829
      %v831 = vrcp.pop %v824
      %v832 = vmul.f32 1.0, %v831
      %v833 = vmul.f32 %v820, %v832
      %v834 = vsub.f32 %v830, %v827
      %v835 = vmul.f32 %v833, %v834
      %836 = vadd.xlane.f32.xlu0 %v835
      %v837 = vpop.xlane.xlu0 %836
      %v838 = vrot.slane %v837, 4
      %v839 = vadd.f32 %v837, %v838
      %v840 = vrot.slane %v839, 2
      %v841 = vadd.f32 %v839, %v840
      %v842 = vrot.slane %v841, 1
      %v843 = vadd.f32 %v841, %v842
      %s844 = vtos %v843
      %s845 = smul.f32 %s844, 9.0
      %v846 = vrcp.pop 1024.0
      %s847 = vtos %v846
      %s848 = smul.f32 %s845, %s847
      %v849 = vld [vmem:[#allocation3] sm:$0x1]
      %v850 = vmul.f32 %v849, 0.5
      %s851 = smul.f32 %s848, 0.5
      %v852 = vstv %s851
      %v853 = vadd.f32 %v850, %v852
      %855 = vset.pattern.permute.xlu0 0
      %856 = vperm.xlu0 %855, %v853
      %v857 = vpop.permute.xlu0 %856
      %v859 = vlaneseq
      %v860 = vshrl.u32 %v859, 7
      %v861 = vsub.s32 0, %v860
      %v862 = vrot.slane %v857, %v861
      %863 = vst [vmem:[#allocation10] sm:$0x1] %v862
    $region49: #{tpu_custom_call.1} parent=1 // pred_fallthru
      _
    // Predicated region
    $region50: #{tpu_custom_call.1} parent=1 // pred_check
      _
    $region51: #{tpu_custom_call.1} parent=1 // pred_check_branch
      %865 = sbr.rel (0) target = $region53
    $region52: #{tpu_custom_call.1} parent=1 // pred_region
      %s867 = ssub.s32 16, 16
      %868 = vsyncadd [#allocation6], %s867
      %s870 = sshll.u32 [#allocation10], 4
      %s871 = int_to_ptr.vmem [resolvable:$true] %s870
      %873 = dma.vmem_to_hbm [thread:$0]  %s871, 16, %s7, [#allocation6]
    $region53: #{tpu_custom_call.1} parent=1 // pred_fallthru
      _
    // Predicated region
    $region54: #{tpu_custom_call.1} parent=1 // pred_check
      _
    $region55: #{tpu_custom_call.1} parent=1 // pred_check_branch
      %875 = sbr.rel (0) target = $region57
    $region56: #{tpu_custom_call.1} parent=1 // pred_region
      %876 = dma.done [#allocation6], 16
    $region57: #{tpu_custom_call.1} parent=1 // pred_fallthru
      _
    %877 = vsyncpa [#allocation5], 1
    %878 = vsyncpa [#allocation8], 1
    %879 = vsyncpa [#allocation6], 1

</llo_original>
